<compile_context>
chip_gen: v7x
topology: tpu7x:2x2x1
jax: 0.10.0
libtpu: 0.0.40
codegen_flags: <defaults>
</compile_context>

<pallas_src>
import jax
import jax.numpy as jnp
import numpy as np
from jax.experimental import pallas as pl
from jax.experimental.pallas import tpu as pltpu

# ----------------------------- model dims ---------------------------------
T = 8            # sequence length
B = 2            # real batch size
B_PAD = 8        # batch padded to one full sublane tile inside the kernel
D = 32           # input_size
HID = 32         # hidden_size (bidirectional concat width)
H = HID // 2     # per-direction hidden size
C = 8            # num_classes


def intent_bilstm_kernel(x_ref, hc0_ref, w_ref, b_ref, out_ref):
    # x_ref    : (T*B_PAD, D)  bf16, rows [t*B_PAD, (t+1)*B_PAD) = timestep t
    # hc0_ref  : (4, B_PAD, H) f32  -> [h0_fwd, h0_rev, c0_fwd, c0_rev]
    # w_ref    : (D + 2H, 8H)  bf16 weight slab
    # b_ref    : (2, 8H)       f32  bias slab
    bf16 = jnp.bfloat16
    f32 = jnp.float32

    # ---- unpack the packed slabs once (loop-invariant, off critical path) --
    w = w_ref[...]                                   # (64, 128) bf16, 16 KiB
    wih_cat = w[0:D, :]                              # (D, 8H)  [fwd | rev]
    whh_f = w[D:D + H, 0:4 * H]                      # (H, 4H)
    whh_r = w[D:D + H, 4 * H:8 * H]                  # (H, 4H)
    wout_f = w[D + H:D + 2 * H, 0:C]                 # (H, C)
    wout_b = w[D + H:D + 2 * H, C:2 * C]             # (H, C)
    b = b_ref[...]
    b_lstm = b[0:1, :]                               # (1, 8H) = [bf | br]
    b_out = b[1:2, 0:C]                              # (1, C)

    # ---- single MXU pass: input projection for ALL T forward steps AND the
    #      one backward step, bias folded in.  (T*B_PAD, 8H) f32.
    xw = jnp.dot(x_ref[...], wih_cat, preferred_element_type=f32) + b_lstm
    xw_f = xw[:, 0:4 * H]                            # forward-direction gates

    # ---- backward direction: out[-1] needs exactly ONE backward step on
    #      x[T-1] from (h0[1], c0[1]); independent of the forward recurrence,
    #      so issue it first and let its latency hide under the loop.
    gb = (xw[(T - 1) * B_PAD:T * B_PAD, 4 * H:8 * H]
          + jnp.dot(hc0_ref[1].astype(bf16), whh_r, preferred_element_type=f32))
    sb = jax.nn.sigmoid(gb[:, 0:3 * H])              # fused [i | f | o] sigmoid
    c_b = sb[:, H:2 * H] * hc0_ref[3] + sb[:, 0:H] * jnp.tanh(gb[:, 3 * H:4 * H])
    h_b = sb[:, 2 * H:3 * H] * jnp.tanh(c_b)         # (B_PAD, H)

    # ---- forward recurrence, fully unrolled (T=8 static).  Serial critical
    #      path per step: ONE fused (Bp,H)@(H,4H) dot + ONE fused sigmoid
    #      + two tanh; gate-slice realignments go to the XLU slot.
    h = hc0_ref[0]                                   # (B_PAD, H) f32
    c = hc0_ref[2]
    for t in range(T):
        r = t * B_PAD
        g = xw_f[r:r + B_PAD, :] + jnp.dot(h.astype(bf16), whh_f,
                                           preferred_element_type=f32)
        s = jax.nn.sigmoid(g[:, 0:3 * H])            # [i | f | o]
        c = s[:, H:2 * H] * c + s[:, 0:H] * jnp.tanh(g[:, 3 * H:4 * H])
        h = s[:, 2 * H:3 * H] * jnp.tanh(c)

    # ---- hidden2intent + exact softmax (concat avoided via split Wout) ----
    logits = (jnp.dot(h.astype(bf16), wout_f, preferred_element_type=f32)
              + jnp.dot(h_b.astype(bf16), wout_b, preferred_element_type=f32)
              + b_out)                               # (B_PAD, C)
    m = jnp.max(logits, axis=-1, keepdims=True)
    e = jnp.exp(logits - m)
    out_ref[...] = e / jnp.sum(e, axis=-1, keepdims=True)


def intent_bilstm(x, h0, c0, params):
    (wih_f, whh_f, bf, wih_r, whh_r, br, wout, bout) = params
    f32, bf16 = jnp.float32, jnp.bfloat16

    # gate-column permutation (i, f, g, o) -> (i, f, o, g): one fused sigmoid
    # over [:, :3H], one tanh over [:, 3H:].
    def perm(a):
        return jnp.concatenate(
            [a[..., :2 * H], a[..., 3 * H:4 * H], a[..., 2 * H:3 * H]], axis=-1)

    # ---- packed weight slab (bf16): (D + 2H, 8H) = (64, 128) --------------
    wih_cat = jnp.concatenate([perm(wih_f), perm(wih_r)], axis=-1)       # (32,128)
    whh_cat = jnp.concatenate([perm(whh_f), perm(whh_r)], axis=-1)       # (16,128)
    wout_row = jnp.concatenate(
        [wout[:H, :], wout[H:, :], jnp.zeros((H, 8 * H - 2 * C), f32)], axis=-1)
    w_slab = jnp.concatenate([wih_cat, whh_cat, wout_row], axis=0).astype(bf16)

    # ---- packed bias slab (f32): (2, 8H) ----------------------------------
    b_lstm = jnp.concatenate([perm(bf), perm(br)], axis=-1)              # (1,128)
    b_out = jnp.concatenate([bout, jnp.zeros((1, 8 * H - C), f32)], axis=-1)
    b_slab = jnp.concatenate([b_lstm, b_out], axis=0)                    # (2,128)

    # ---- pad batch to one sublane tile, pack states, cast x to bf16 -------
    pad = B_PAD - B
    x_p = jnp.pad(x, ((0, 0), (0, pad), (0, 0)))
    x2d = x_p.reshape(T * B_PAD, D).astype(bf16)
    h0_p = jnp.pad(h0, ((0, 0), (0, pad), (0, 0)))
    c0_p = jnp.pad(c0, ((0, 0), (0, pad), (0, 0)))
    hc0 = jnp.concatenate([h0_p, c0_p], axis=0)      # (4, B_PAD, H)

    vmem = pl.BlockSpec(memory_space=pltpu.MemorySpace.VMEM)
    out = pl.pallas_call(
        intent_bilstm_kernel,
        out_shape=jax.ShapeDtypeStruct((B_PAD, C), f32),
        in_specs=[vmem] * 4,
        out_specs=vmem,
    )(x2d, hc0, w_slab, b_slab)
    return out[:B]


# ------------------------- pure-JAX reference ------------------------------
# Mirrors the module math in f32 with the kernel's operand precision:
# matmul operands rounded to bf16, accumulation in f32 (standard TPU MXU
# numerics), so the comparison isolates kernel bugs, not dtype policy.
def reference(x, h0, c0, params):
    (wih_f, whh_f, bf, wih_r, whh_r, br, wout, bout) = params

    def bdot(a, w):
        return jnp.dot(a.astype(jnp.bfloat16).astype(jnp.float32),
                       w.astype(jnp.bfloat16).astype(jnp.float32),
                       precision=jax.lax.Precision.HIGHEST)

    def cell(x_t, h, c, wih, whh, b):
        g = bdot(x_t, wih) + bdot(h, whh) + b
        i = jax.nn.sigmoid(g[:, :H])
        f = jax.nn.sigmoid(g[:, H:2 * H])
        gg = jnp.tanh(g[:, 2 * H:3 * H])
        o = jax.nn.sigmoid(g[:, 3 * H:])
        c_new = f * c + i * gg
        return o * jnp.tanh(c_new), c_new

    h, c = h0[0], c0[0]
    for t in range(T):
        h, c = cell(x[t], h, c, wih_f, whh_f, bf)
    h_b, _ = cell(x[T - 1], h0[1], c0[1], wih_r, whh_r, br)
    logits = bdot(h, wout[:H]) + bdot(h_b, wout[H:]) + bout
    return jax.nn.softmax(logits, axis=-1)


if __name__ == "__main__":
    key = jax.random.PRNGKey(0)
    keys = jax.random.split(key, 12)
    k = 1.0 / np.sqrt(H)

    def unif(kk, shape):
        return jax.random.uniform(kk, shape, jnp.float32, -k, k)

    # LSTM params (transposed relative to PyTorch: (in, 4H) / (H, 4H)),
    # gate order (i, f, g, o), biases combined (b_ih + b_hh), kept 2-D.
    wih_f = unif(keys[0], (D, 4 * H))
    whh_f = unif(keys[1], (H, 4 * H))
    bf = unif(keys[2], (1, 4 * H)) + unif(keys[3], (1, 4 * H))
    wih_r = unif(keys[4], (D, 4 * H))
    whh_r = unif(keys[5], (H, 4 * H))
    br = unif(keys[6], (1, 4 * H)) + unif(keys[7], (1, 4 * H))
    kl = 1.0 / np.sqrt(HID)
    wout = jax.random.uniform(keys[8], (HID, C), jnp.float32, -kl, kl)
    bout = jax.random.uniform(keys[9], (1, C), jnp.float32, -kl, kl)
    params = (wih_f, whh_f, bf, wih_r, whh_r, br, wout, bout)

    # inputs: x (T, B, D); random initial states like torch.randn(2, B, H)
    x = jax.random.normal(keys[10], (T, B, D), jnp.float32)
    hc_key0, hc_key1 = jax.random.split(keys[11])
    h0 = jax.random.normal(hc_key0, (2, B, H), jnp.float32)
    c0 = jax.random.normal(hc_key1, (2, B, H), jnp.float32)

    out = jax.block_until_ready(intent_bilstm(x, h0, c0, params))
    ref = reference(x, h0, c0, params)
    np.testing.assert_allclose(np.asarray(out), np.asarray(ref),
                               rtol=2e-3, atol=1e-5)
    print("KERNEL_OK")
</pallas_src>

<mosaic_0001>
module attributes {stable_mosaic.version = 11 : i64} {
  func.func @intent_bilstm_kernel(%arg0: memref<64x32xbf16, #tpu.memory_space<vmem>>, %arg1: memref<4x8x16xf32, #tpu.memory_space<vmem>>, %arg2: memref<64x128xbf16, #tpu.memory_space<vmem>>, %arg3: memref<2x128xf32, #tpu.memory_space<vmem>>, %arg4: memref<8x8xf32, #tpu.memory_space<vmem>>) attributes {dimension_semantics = [], scalar_prefetch = 0 : i64, scratch_operands = 0 : i64, tpu.core_type = #tpu.core_type<tc>} {
    %c0 = arith.constant 0 : index
    %c0_0 = arith.constant 0 : index
    %0 = vector.load %arg2[%c0, %c0_0] : memref<64x128xbf16, #tpu.memory_space<vmem>>, vector<64x128xbf16>
    %1 = vector.extract_strided_slice %0 {offsets = [0, 0], sizes = [32, 128], strides = [1, 1]} : vector<64x128xbf16> to vector<32x128xbf16>
    %2 = vector.extract_strided_slice %0 {offsets = [32, 0], sizes = [16, 64], strides = [1, 1]} : vector<64x128xbf16> to vector<16x64xbf16>
    %3 = vector.extract_strided_slice %0 {offsets = [32, 64], sizes = [16, 64], strides = [1, 1]} : vector<64x128xbf16> to vector<16x64xbf16>
    %4 = vector.extract_strided_slice %0 {offsets = [48, 0], sizes = [16, 8], strides = [1, 1]} : vector<64x128xbf16> to vector<16x8xbf16>
    %5 = vector.extract_strided_slice %0 {offsets = [48, 8], sizes = [16, 8], strides = [1, 1]} : vector<64x128xbf16> to vector<16x8xbf16>
    %c0_1 = arith.constant 0 : index
    %c0_2 = arith.constant 0 : index
    %6 = vector.load %arg3[%c0_1, %c0_2] : memref<2x128xf32, #tpu.memory_space<vmem>>, vector<2x128xf32>
    %7 = vector.extract_strided_slice %6 {offsets = [0, 0], sizes = [1, 128], strides = [1, 1]} : vector<2x128xf32> to vector<1x128xf32>
    %8 = vector.extract_strided_slice %6 {offsets = [1, 0], sizes = [1, 8], strides = [1, 1]} : vector<2x128xf32> to vector<1x8xf32>
    %c0_3 = arith.constant 0 : index
    %c0_4 = arith.constant 0 : index
    %9 = vector.load %arg0[%c0_3, %c0_4] : memref<64x32xbf16, #tpu.memory_space<vmem>>, vector<64x32xbf16>
    %cst = arith.constant dense<0.000000e+00> : vector<64x128xf32>
    %10 = tpu.matmul %9, %1, %cst {dimension_numbers = #tpu.dot_dimension_numbers<[1], [0], [0], [1], [0, 0, 1, 1], [], []>} : vector<64x32xbf16>, vector<32x128xbf16>, vector<64x128xf32> -> vector<64x128xf32>
    %11 = vector.broadcast %7 : vector<1x128xf32> to vector<64x128xf32>
    %12 = arith.addf %10, %11 : vector<64x128xf32>
    %13 = vector.extract_strided_slice %12 {offsets = [0, 0], sizes = [64, 64], strides = [1, 1]} : vector<64x128xf32> to vector<64x64xf32>
    %14 = vector.extract_strided_slice %12 {offsets = [56, 64], sizes = [8, 64], strides = [1, 1]} : vector<64x128xf32> to vector<8x64xf32>
    %c1 = arith.constant 1 : index
    %c0_5 = arith.constant 0 : index
    %c0_6 = arith.constant 0 : index
    %15 = vector.load %arg1[%c1, %c0_5, %c0_6] : memref<4x8x16xf32, #tpu.memory_space<vmem>>, vector<1x8x16xf32>
    %16 = vector.shape_cast %15 : vector<1x8x16xf32> to vector<8x16xf32>
    %17 = arith.truncf %16 : vector<8x16xf32> to vector<8x16xbf16>
    %cst_7 = arith.constant dense<0.000000e+00> : vector<8x64xf32>
    %18 = tpu.matmul %17, %3, %cst_7 {dimension_numbers = #tpu.dot_dimension_numbers<[1], [0], [0], [1], [0, 0, 1, 1], [], []>} : vector<8x16xbf16>, vector<16x64xbf16>, vector<8x64xf32> -> vector<8x64xf32>
    %19 = arith.addf %14, %18 : vector<8x64xf32>
    %20 = vector.extract_strided_slice %19 {offsets = [0, 0], sizes = [8, 48], strides = [1, 1]} : vector<8x64xf32> to vector<8x48xf32>
    %21 = arith.negf %20 : vector<8x48xf32>
    %22 = math.exp %21 : vector<8x48xf32>
    %cst_8 = arith.constant 1.000000e+00 : f32
    %23 = vector.broadcast %cst_8 : f32 to vector<8x48xf32>
    %24 = arith.addf %23, %22 : vector<8x48xf32>
    %25 = arith.divf %23, %24 : vector<8x48xf32>
    %26 = vector.extract_strided_slice %25 {offsets = [0, 16], sizes = [8, 16], strides = [1, 1]} : vector<8x48xf32> to vector<8x16xf32>
    %c3 = arith.constant 3 : index
    %c0_9 = arith.constant 0 : index
    %c0_10 = arith.constant 0 : index
    %27 = vector.load %arg1[%c3, %c0_9, %c0_10] : memref<4x8x16xf32, #tpu.memory_space<vmem>>, vector<1x8x16xf32>
    %28 = vector.shape_cast %27 : vector<1x8x16xf32> to vector<8x16xf32>
    %29 = arith.mulf %26, %28 : vector<8x16xf32>
    %30 = vector.extract_strided_slice %25 {offsets = [0, 0], sizes = [8, 16], strides = [1, 1]} : vector<8x48xf32> to vector<8x16xf32>
    %31 = vector.extract_strided_slice %19 {offsets = [0, 48], sizes = [8, 16], strides = [1, 1]} : vector<8x64xf32> to vector<8x16xf32>
    %32 = math.tanh %31 : vector<8x16xf32>
    %33 = arith.mulf %30, %32 : vector<8x16xf32>
    %34 = arith.addf %29, %33 : vector<8x16xf32>
    %35 = vector.extract_strided_slice %25 {offsets = [0, 32], sizes = [8, 16], strides = [1, 1]} : vector<8x48xf32> to vector<8x16xf32>
    %36 = math.tanh %34 : vector<8x16xf32>
    %37 = arith.mulf %35, %36 : vector<8x16xf32>
    %c0_11 = arith.constant 0 : index
    %c0_12 = arith.constant 0 : index
    %c0_13 = arith.constant 0 : index
    %38 = vector.load %arg1[%c0_11, %c0_12, %c0_13] : memref<4x8x16xf32, #tpu.memory_space<vmem>>, vector<1x8x16xf32>
    %39 = vector.shape_cast %38 : vector<1x8x16xf32> to vector<8x16xf32>
    %c2 = arith.constant 2 : index
    %c0_14 = arith.constant 0 : index
    %c0_15 = arith.constant 0 : index
    %40 = vector.load %arg1[%c2, %c0_14, %c0_15] : memref<4x8x16xf32, #tpu.memory_space<vmem>>, vector<1x8x16xf32>
    %41 = vector.shape_cast %40 : vector<1x8x16xf32> to vector<8x16xf32>
    %42 = vector.extract_strided_slice %13 {offsets = [0, 0], sizes = [8, 64], strides = [1, 1]} : vector<64x64xf32> to vector<8x64xf32>
    %43 = arith.truncf %39 : vector<8x16xf32> to vector<8x16xbf16>
    %cst_16 = arith.constant dense<0.000000e+00> : vector<8x64xf32>
    %44 = tpu.matmul %43, %2, %cst_16 {dimension_numbers = #tpu.dot_dimension_numbers<[1], [0], [0], [1], [0, 0, 1, 1], [], []>} : vector<8x16xbf16>, vector<16x64xbf16>, vector<8x64xf32> -> vector<8x64xf32>
    %45 = arith.addf %42, %44 : vector<8x64xf32>
    %46 = vector.extract_strided_slice %45 {offsets = [0, 0], sizes = [8, 48], strides = [1, 1]} : vector<8x64xf32> to vector<8x48xf32>
    %47 = arith.negf %46 : vector<8x48xf32>
    %48 = math.exp %47 : vector<8x48xf32>
    %cst_17 = arith.constant 1.000000e+00 : f32
    %49 = vector.broadcast %cst_17 : f32 to vector<8x48xf32>
    %50 = arith.addf %49, %48 : vector<8x48xf32>
    %51 = arith.divf %49, %50 : vector<8x48xf32>
    %52 = vector.extract_strided_slice %51 {offsets = [0, 16], sizes = [8, 16], strides = [1, 1]} : vector<8x48xf32> to vector<8x16xf32>
    %53 = arith.mulf %52, %41 : vector<8x16xf32>
    %54 = vector.extract_strided_slice %51 {offsets = [0, 0], sizes = [8, 16], strides = [1, 1]} : vector<8x48xf32> to vector<8x16xf32>
    %55 = vector.extract_strided_slice %45 {offsets = [0, 48], sizes = [8, 16], strides = [1, 1]} : vector<8x64xf32> to vector<8x16xf32>
    %56 = math.tanh %55 : vector<8x16xf32>
    %57 = arith.mulf %54, %56 : vector<8x16xf32>
    %58 = arith.addf %53, %57 : vector<8x16xf32>
    %59 = vector.extract_strided_slice %51 {offsets = [0, 32], sizes = [8, 16], strides = [1, 1]} : vector<8x48xf32> to vector<8x16xf32>
    %60 = math.tanh %58 : vector<8x16xf32>
    %61 = arith.mulf %59, %60 : vector<8x16xf32>
    %62 = vector.extract_strided_slice %13 {offsets = [8, 0], sizes = [8, 64], strides = [1, 1]} : vector<64x64xf32> to vector<8x64xf32>
    %63 = arith.truncf %61 : vector<8x16xf32> to vector<8x16xbf16>
    %cst_18 = arith.constant dense<0.000000e+00> : vector<8x64xf32>
    %64 = tpu.matmul %63, %2, %cst_18 {dimension_numbers = #tpu.dot_dimension_numbers<[1], [0], [0], [1], [0, 0, 1, 1], [], []>} : vector<8x16xbf16>, vector<16x64xbf16>, vector<8x64xf32> -> vector<8x64xf32>
    %65 = arith.addf %62, %64 : vector<8x64xf32>
    %66 = vector.extract_strided_slice %65 {offsets = [0, 0], sizes = [8, 48], strides = [1, 1]} : vector<8x64xf32> to vector<8x48xf32>
    %67 = arith.negf %66 : vector<8x48xf32>
    %68 = math.exp %67 : vector<8x48xf32>
    %cst_19 = arith.constant 1.000000e+00 : f32
    %69 = vector.broadcast %cst_19 : f32 to vector<8x48xf32>
    %70 = arith.addf %69, %68 : vector<8x48xf32>
    %71 = arith.divf %69, %70 : vector<8x48xf32>
    %72 = vector.extract_strided_slice %71 {offsets = [0, 16], sizes = [8, 16], strides = [1, 1]} : vector<8x48xf32> to vector<8x16xf32>
    %73 = arith.mulf %72, %58 : vector<8x16xf32>
    %74 = vector.extract_strided_slice %71 {offsets = [0, 0], sizes = [8, 16], strides = [1, 1]} : vector<8x48xf32> to vector<8x16xf32>
    %75 = vector.extract_strided_slice %65 {offsets = [0, 48], sizes = [8, 16], strides = [1, 1]} : vector<8x64xf32> to vector<8x16xf32>
    %76 = math.tanh %75 : vector<8x16xf32>
    %77 = arith.mulf %74, %76 : vector<8x16xf32>
    %78 = arith.addf %73, %77 : vector<8x16xf32>
    %79 = vector.extract_strided_slice %71 {offsets = [0, 32], sizes = [8, 16], strides = [1, 1]} : vector<8x48xf32> to vector<8x16xf32>
    %80 = math.tanh %78 : vector<8x16xf32>
    %81 = arith.mulf %79, %80 : vector<8x16xf32>
    %82 = vector.extract_strided_slice %13 {offsets = [16, 0], sizes = [8, 64], strides = [1, 1]} : vector<64x64xf32> to vector<8x64xf32>
    %83 = arith.truncf %81 : vector<8x16xf32> to vector<8x16xbf16>
    %cst_20 = arith.constant dense<0.000000e+00> : vector<8x64xf32>
    %84 = tpu.matmul %83, %2, %cst_20 {dimension_numbers = #tpu.dot_dimension_numbers<[1], [0], [0], [1], [0, 0, 1, 1], [], []>} : vector<8x16xbf16>, vector<16x64xbf16>, vector<8x64xf32> -> vector<8x64xf32>
    %85 = arith.addf %82, %84 : vector<8x64xf32>
    %86 = vector.extract_strided_slice %85 {offsets = [0, 0], sizes = [8, 48], strides = [1, 1]} : vector<8x64xf32> to vector<8x48xf32>
    %87 = arith.negf %86 : vector<8x48xf32>
    %88 = math.exp %87 : vector<8x48xf32>
    %cst_21 = arith.constant 1.000000e+00 : f32
    %89 = vector.broadcast %cst_21 : f32 to vector<8x48xf32>
    %90 = arith.addf %89, %88 : vector<8x48xf32>
    %91 = arith.divf %89, %90 : vector<8x48xf32>
    %92 = vector.extract_strided_slice %91 {offsets = [0, 16], sizes = [8, 16], strides = [1, 1]} : vector<8x48xf32> to vector<8x16xf32>
    %93 = arith.mulf %92, %78 : vector<8x16xf32>
    %94 = vector.extract_strided_slice %91 {offsets = [0, 0], sizes = [8, 16], strides = [1, 1]} : vector<8x48xf32> to vector<8x16xf32>
    %95 = vector.extract_strided_slice %85 {offsets = [0, 48], sizes = [8, 16], strides = [1, 1]} : vector<8x64xf32> to vector<8x16xf32>
    %96 = math.tanh %95 : vector<8x16xf32>
    %97 = arith.mulf %94, %96 : vector<8x16xf32>
    %98 = arith.addf %93, %97 : vector<8x16xf32>
    %99 = vector.extract_strided_slice %91 {offsets = [0, 32], sizes = [8, 16], strides = [1, 1]} : vector<8x48xf32> to vector<8x16xf32>
    %100 = math.tanh %98 : vector<8x16xf32>
    %101 = arith.mulf %99, %100 : vector<8x16xf32>
    %102 = vector.extract_strided_slice %13 {offsets = [24, 0], sizes = [8, 64], strides = [1, 1]} : vector<64x64xf32> to vector<8x64xf32>
    %103 = arith.truncf %101 : vector<8x16xf32> to vector<8x16xbf16>
    %cst_22 = arith.constant dense<0.000000e+00> : vector<8x64xf32>
    %104 = tpu.matmul %103, %2, %cst_22 {dimension_numbers = #tpu.dot_dimension_numbers<[1], [0], [0], [1], [0, 0, 1, 1], [], []>} : vector<8x16xbf16>, vector<16x64xbf16>, vector<8x64xf32> -> vector<8x64xf32>
    %105 = arith.addf %102, %104 : vector<8x64xf32>
    %106 = vector.extract_strided_slice %105 {offsets = [0, 0], sizes = [8, 48], strides = [1, 1]} : vector<8x64xf32> to vector<8x48xf32>
    %107 = arith.negf %106 : vector<8x48xf32>
    %108 = math.exp %107 : vector<8x48xf32>
    %cst_23 = arith.constant 1.000000e+00 : f32
    %109 = vector.broadcast %cst_23 : f32 to vector<8x48xf32>
    %110 = arith.addf %109, %108 : vector<8x48xf32>
    %111 = arith.divf %109, %110 : vector<8x48xf32>
    %112 = vector.extract_strided_slice %111 {offsets = [0, 16], sizes = [8, 16], strides = [1, 1]} : vector<8x48xf32> to vector<8x16xf32>
    %113 = arith.mulf %112, %98 : vector<8x16xf32>
    %114 = vector.extract_strided_slice %111 {offsets = [0, 0], sizes = [8, 16], strides = [1, 1]} : vector<8x48xf32> to vector<8x16xf32>
    %115 = vector.extract_strided_slice %105 {offsets = [0, 48], sizes = [8, 16], strides = [1, 1]} : vector<8x64xf32> to vector<8x16xf32>
    %116 = math.tanh %115 : vector<8x16xf32>
    %117 = arith.mulf %114, %116 : vector<8x16xf32>
    %118 = arith.addf %113, %117 : vector<8x16xf32>
    %119 = vector.extract_strided_slice %111 {offsets = [0, 32], sizes = [8, 16], strides = [1, 1]} : vector<8x48xf32> to vector<8x16xf32>
    %120 = math.tanh %118 : vector<8x16xf32>
    %121 = arith.mulf %119, %120 : vector<8x16xf32>
    %122 = vector.extract_strided_slice %13 {offsets = [32, 0], sizes = [8, 64], strides = [1, 1]} : vector<64x64xf32> to vector<8x64xf32>
    %123 = arith.truncf %121 : vector<8x16xf32> to vector<8x16xbf16>
    %cst_24 = arith.constant dense<0.000000e+00> : vector<8x64xf32>
    %124 = tpu.matmul %123, %2, %cst_24 {dimension_numbers = #tpu.dot_dimension_numbers<[1], [0], [0], [1], [0, 0, 1, 1], [], []>} : vector<8x16xbf16>, vector<16x64xbf16>, vector<8x64xf32> -> vector<8x64xf32>
    %125 = arith.addf %122, %124 : vector<8x64xf32>
    %126 = vector.extract_strided_slice %125 {offsets = [0, 0], sizes = [8, 48], strides = [1, 1]} : vector<8x64xf32> to vector<8x48xf32>
    %127 = arith.negf %126 : vector<8x48xf32>
    %128 = math.exp %127 : vector<8x48xf32>
    %cst_25 = arith.constant 1.000000e+00 : f32
    %129 = vector.broadcast %cst_25 : f32 to vector<8x48xf32>
    %130 = arith.addf %129, %128 : vector<8x48xf32>
    %131 = arith.divf %129, %130 : vector<8x48xf32>
    %132 = vector.extract_strided_slice %131 {offsets = [0, 16], sizes = [8, 16], strides = [1, 1]} : vector<8x48xf32> to vector<8x16xf32>
    %133 = arith.mulf %132, %118 : vector<8x16xf32>
    %134 = vector.extract_strided_slice %131 {offsets = [0, 0], sizes = [8, 16], strides = [1, 1]} : vector<8x48xf32> to vector<8x16xf32>
    %135 = vector.extract_strided_slice %125 {offsets = [0, 48], sizes = [8, 16], strides = [1, 1]} : vector<8x64xf32> to vector<8x16xf32>
    %136 = math.tanh %135 : vector<8x16xf32>
    %137 = arith.mulf %134, %136 : vector<8x16xf32>
    %138 = arith.addf %133, %137 : vector<8x16xf32>
    %139 = vector.extract_strided_slice %131 {offsets = [0, 32], sizes = [8, 16], strides = [1, 1]} : vector<8x48xf32> to vector<8x16xf32>
    %140 = math.tanh %138 : vector<8x16xf32>
    %141 = arith.mulf %139, %140 : vector<8x16xf32>
    %142 = vector.extract_strided_slice %13 {offsets = [40, 0], sizes = [8, 64], strides = [1, 1]} : vector<64x64xf32> to vector<8x64xf32>
    %143 = arith.truncf %141 : vector<8x16xf32> to vector<8x16xbf16>
    %cst_26 = arith.constant dense<0.000000e+00> : vector<8x64xf32>
    %144 = tpu.matmul %143, %2, %cst_26 {dimension_numbers = #tpu.dot_dimension_numbers<[1], [0], [0], [1], [0, 0, 1, 1], [], []>} : vector<8x16xbf16>, vector<16x64xbf16>, vector<8x64xf32> -> vector<8x64xf32>
    %145 = arith.addf %142, %144 : vector<8x64xf32>
    %146 = vector.extract_strided_slice %145 {offsets = [0, 0], sizes = [8, 48], strides = [1, 1]} : vector<8x64xf32> to vector<8x48xf32>
    %147 = arith.negf %146 : vector<8x48xf32>
    %148 = math.exp %147 : vector<8x48xf32>
    %cst_27 = arith.constant 1.000000e+00 : f32
    %149 = vector.broadcast %cst_27 : f32 to vector<8x48xf32>
    %150 = arith.addf %149, %148 : vector<8x48xf32>
    %151 = arith.divf %149, %150 : vector<8x48xf32>
    %152 = vector.extract_strided_slice %151 {offsets = [0, 16], sizes = [8, 16], strides = [1, 1]} : vector<8x48xf32> to vector<8x16xf32>
    %153 = arith.mulf %152, %138 : vector<8x16xf32>
    %154 = vector.extract_strided_slice %151 {offsets = [0, 0], sizes = [8, 16], strides = [1, 1]} : vector<8x48xf32> to vector<8x16xf32>
    %155 = vector.extract_strided_slice %145 {offsets = [0, 48], sizes = [8, 16], strides = [1, 1]} : vector<8x64xf32> to vector<8x16xf32>
    %156 = math.tanh %155 : vector<8x16xf32>
    %157 = arith.mulf %154, %156 : vector<8x16xf32>
    %158 = arith.addf %153, %157 : vector<8x16xf32>
    %159 = vector.extract_strided_slice %151 {offsets = [0, 32], sizes = [8, 16], strides = [1, 1]} : vector<8x48xf32> to vector<8x16xf32>
    %160 = math.tanh %158 : vector<8x16xf32>
    %161 = arith.mulf %159, %160 : vector<8x16xf32>
    %162 = vector.extract_strided_slice %13 {offsets = [48, 0], sizes = [8, 64], strides = [1, 1]} : vector<64x64xf32> to vector<8x64xf32>
    %163 = arith.truncf %161 : vector<8x16xf32> to vector<8x16xbf16>
    %cst_28 = arith.constant dense<0.000000e+00> : vector<8x64xf32>
    %164 = tpu.matmul %163, %2, %cst_28 {dimension_numbers = #tpu.dot_dimension_numbers<[1], [0], [0], [1], [0, 0, 1, 1], [], []>} : vector<8x16xbf16>, vector<16x64xbf16>, vector<8x64xf32> -> vector<8x64xf32>
    %165 = arith.addf %162, %164 : vector<8x64xf32>
    %166 = vector.extract_strided_slice %165 {offsets = [0, 0], sizes = [8, 48], strides = [1, 1]} : vector<8x64xf32> to vector<8x48xf32>
    %167 = arith.negf %166 : vector<8x48xf32>
    %168 = math.exp %167 : vector<8x48xf32>
    %cst_29 = arith.constant 1.000000e+00 : f32
    %169 = vector.broadcast %cst_29 : f32 to vector<8x48xf32>
    %170 = arith.addf %169, %168 : vector<8x48xf32>
    %171 = arith.divf %169, %170 : vector<8x48xf32>
    %172 = vector.extract_strided_slice %171 {offsets = [0, 16], sizes = [8, 16], strides = [1, 1]} : vector<8x48xf32> to vector<8x16xf32>
    %173 = arith.mulf %172, %158 : vector<8x16xf32>
    %174 = vector.extract_strided_slice %171 {offsets = [0, 0], sizes = [8, 16], strides = [1, 1]} : vector<8x48xf32> to vector<8x16xf32>
    %175 = vector.extract_strided_slice %165 {offsets = [0, 48], sizes = [8, 16], strides = [1, 1]} : vector<8x64xf32> to vector<8x16xf32>
    %176 = math.tanh %175 : vector<8x16xf32>
    %177 = arith.mulf %174, %176 : vector<8x16xf32>
    %178 = arith.addf %173, %177 : vector<8x16xf32>
    %179 = vector.extract_strided_slice %171 {offsets = [0, 32], sizes = [8, 16], strides = [1, 1]} : vector<8x48xf32> to vector<8x16xf32>
    %180 = math.tanh %178 : vector<8x16xf32>
    %181 = arith.mulf %179, %180 : vector<8x16xf32>
    %182 = vector.extract_strided_slice %13 {offsets = [56, 0], sizes = [8, 64], strides = [1, 1]} : vector<64x64xf32> to vector<8x64xf32>
    %183 = arith.truncf %181 : vector<8x16xf32> to vector<8x16xbf16>
    %cst_30 = arith.constant dense<0.000000e+00> : vector<8x64xf32>
    %184 = tpu.matmul %183, %2, %cst_30 {dimension_numbers = #tpu.dot_dimension_numbers<[1], [0], [0], [1], [0, 0, 1, 1], [], []>} : vector<8x16xbf16>, vector<16x64xbf16>, vector<8x64xf32> -> vector<8x64xf32>
    %185 = arith.addf %182, %184 : vector<8x64xf32>
    %186 = vector.extract_strided_slice %185 {offsets = [0, 0], sizes = [8, 48], strides = [1, 1]} : vector<8x64xf32> to vector<8x48xf32>
    %187 = arith.negf %186 : vector<8x48xf32>
    %188 = math.exp %187 : vector<8x48xf32>
    %cst_31 = arith.constant 1.000000e+00 : f32
    %189 = vector.broadcast %cst_31 : f32 to vector<8x48xf32>
    %190 = arith.addf %189, %188 : vector<8x48xf32>
    %191 = arith.divf %189, %190 : vector<8x48xf32>
    %192 = vector.extract_strided_slice %191 {offsets = [0, 16], sizes = [8, 16], strides = [1, 1]} : vector<8x48xf32> to vector<8x16xf32>
    %193 = arith.mulf %192, %178 : vector<8x16xf32>
    %194 = vector.extract_strided_slice %191 {offsets = [0, 0], sizes = [8, 16], strides = [1, 1]} : vector<8x48xf32> to vector<8x16xf32>
    %195 = vector.extract_strided_slice %185 {offsets = [0, 48], sizes = [8, 16], strides = [1, 1]} : vector<8x64xf32> to vector<8x16xf32>
    %196 = math.tanh %195 : vector<8x16xf32>
    %197 = arith.mulf %194, %196 : vector<8x16xf32>
    %198 = arith.addf %193, %197 : vector<8x16xf32>
    %199 = vector.extract_strided_slice %191 {offsets = [0, 32], sizes = [8, 16], strides = [1, 1]} : vector<8x48xf32> to vector<8x16xf32>
    %200 = math.tanh %198 : vector<8x16xf32>
    %201 = arith.mulf %199, %200 : vector<8x16xf32>
    %202 = arith.truncf %201 : vector<8x16xf32> to vector<8x16xbf16>
    %cst_32 = arith.constant dense<0.000000e+00> : vector<8x8xf32>
    %203 = tpu.matmul %202, %4, %cst_32 {dimension_numbers = #tpu.dot_dimension_numbers<[1], [0], [0], [1], [0, 0, 1, 1], [], []>} : vector<8x16xbf16>, vector<16x8xbf16>, vector<8x8xf32> -> vector<8x8xf32>
    %204 = arith.truncf %37 : vector<8x16xf32> to vector<8x16xbf16>
    %cst_33 = arith.constant dense<0.000000e+00> : vector<8x8xf32>
    %205 = tpu.matmul %204, %5, %cst_33 {dimension_numbers = #tpu.dot_dimension_numbers<[1], [0], [0], [1], [0, 0, 1, 1], [], []>} : vector<8x16xbf16>, vector<16x8xbf16>, vector<8x8xf32> -> vector<8x8xf32>
    %206 = arith.addf %203, %205 : vector<8x8xf32>
    %207 = vector.broadcast %8 : vector<1x8xf32> to vector<8x8xf32>
    %208 = arith.addf %206, %207 : vector<8x8xf32>
    %cst_34 = arith.constant dense<0xFF800000> : vector<8xf32>
    %209 = vector.multi_reduction <maximumf>, %208, %cst_34 [1] : vector<8x8xf32> to vector<8xf32>
    %210 = vector.shape_cast %209 : vector<8xf32> to vector<8x1xf32>
    %211 = vector.broadcast %210 : vector<8x1xf32> to vector<8x8xf32>
    %212 = arith.subf %208, %211 : vector<8x8xf32>
    %213 = math.exp %212 : vector<8x8xf32>
    %cst_35 = arith.constant dense<0.000000e+00> : vector<8xf32>
    %214 = vector.multi_reduction <add>, %213, %cst_35 [1] : vector<8x8xf32> to vector<8xf32>
    %215 = vector.shape_cast %214 : vector<8xf32> to vector<8x1xf32>
    %216 = vector.broadcast %215 : vector<8x1xf32> to vector<8x8xf32>
    %217 = arith.divf %213, %216 : vector<8x8xf32>
    %c0_36 = arith.constant 0 : index
    %c0_37 = arith.constant 0 : index
    %218 = vector.load %arg4[%c0_36, %c0_37] : memref<8x8xf32, #tpu.memory_space<vmem>>, vector<8x8xf32>
    tpu.vector_store %arg4[%c0_36, %c0_37], %217 {strides = array<i32>} : memref<8x8xf32, #tpu.memory_space<vmem>>, vector<8x8xf32>,
    return
  }
}

</mosaic_0001>

<llo_original>
// kernel: tpu_custom_call.1
$region0: #{tpu_custom_call.1}
  #allocation0 [shape = 'u32[]', space=smem, size = 0x4, offset = 0x4, fixed_abs, tag = 'smem constant byte address 0x4 - core index']
  #allocation1 [shape = 'u32[144,128]{1,0:T(1,128)}', space=vmem, size = 0x12000, scoped, tag = 'internal scratch']
  %s0 = inlined_call_operand.vmem [shape: bf16[64,32], index: 0, kind: input, shape index: {}]
  %s1 = inlined_call_operand.vmem [shape: f32[4,8,16], index: 1, kind: input, shape index: {}]
  %s2 = inlined_call_operand.hbm [shape: bf16[64,128], index: 2, kind: input, shape index: {}]
  %s3 = inlined_call_operand.vmem [shape: f32[2,128], index: 3, kind: input, shape index: {}]
  %s4 = inlined_call_operand.hbm [shape: f32[8,8], index: 4, kind: output, shape index: {}]
  %s5 = sld [smem:[#allocation0]]
  $region30: #{tpu_custom_call.1} parent=0
    _
  %s7 = ssub.s32 1, %s5
  %s8 = scalar_select 0, %s7, %s5
  $region1: #{tpu_custom_call.1} parent=0
    #allocation2 [shape = 'u8[16384]{0}', space=vmem, size = 0x4000, scoped, tag = 'input window, operand 2, single buffered']
    #allocation3 [shape = 's32[1]{0}', space=sflag, size = 0x4, scoped, tag = 'scoped memory for tpu_custom_call.1']
    #allocation4 [shape = 's32[1]{0}', space=sflag, size = 0x4, scoped, tag = 'scoped memory for tpu_custom_call.1']
    #allocation5 [shape = 'u8[4096]{0}', space=vmem, size = 0x1000, scoped, tag = 'output window, operand 0, single buffered']
    %9 = vsyncpa [#allocation3], 0
    %10 = vsyncpa [#allocation4], 0
    // Predicated region
    $region2: #{tpu_custom_call.1} parent=1 // pred_check
      _
    $region3: #{tpu_custom_call.1} parent=1 // pred_check_branch
      %12 = sbr.rel (0) target = $region5
    $region4: #{tpu_custom_call.1} parent=1 // pred_region
      _
    $region5: #{tpu_custom_call.1} parent=1 // pred_fallthru
      _
    // Predicated region
    $region6: #{tpu_custom_call.1} parent=1 // pred_check
      _
    $region7: #{tpu_custom_call.1} parent=1 // pred_check_branch
      %14 = sbr.rel (0) target = $region9
    $region8: #{tpu_custom_call.1} parent=1 // pred_region
      _
    $region9: #{tpu_custom_call.1} parent=1 // pred_fallthru
      _
    // Predicated region
    $region10: #{tpu_custom_call.1} parent=1 // pred_check
      _
    $region11: #{tpu_custom_call.1} parent=1 // pred_check_branch
      %16 = sbr.rel (0) target = $region13
    $region12: #{tpu_custom_call.1} parent=1 // pred_region
      %s18 = ssub.s32 512, 512
      %19 = vsyncadd [#allocation3], %s18
      %s20 = sshll.u32 [#allocation2], 4
      %s21 = int_to_ptr.vmem [resolvable:$true] %s20
      %26 = dma.hbm_to_vmem [thread:$0]  %s2, 512, %s21, [#allocation3], 64, 64, 4
    $region13: #{tpu_custom_call.1} parent=1 // pred_fallthru
      _
    // Predicated region
    $region14: #{tpu_custom_call.1} parent=1 // pred_check
      _
    $region15: #{tpu_custom_call.1} parent=1 // pred_check_branch
      %28 = sbr.rel (0) target = $region17
    $region16: #{tpu_custom_call.1} parent=1 // pred_region
      _
    $region17: #{tpu_custom_call.1} parent=1 // pred_fallthru
      _
    // Predicated region
    $region18: #{tpu_custom_call.1} parent=1 // pred_check
      _
    $region19: #{tpu_custom_call.1} parent=1 // pred_check_branch
      %30 = sbr.rel (0) target = $region21
    $region20: #{tpu_custom_call.1} parent=1 // pred_region
      %31 = dma.done [#allocation3], 512
    $region21: #{tpu_custom_call.1} parent=1 // pred_fallthru
      _
    %v33 = vld [vmem:[#allocation2] sm:$0xf]
    %v34 = vld [vmem:[#allocation2 + $0x4] sm:$0xf]
    %v35 = vld [vmem:[#allocation2 + $0x8] sm:$0xf]
    %v36 = vld [vmem:[#allocation2 + $0xc] sm:$0xf]
    %v37 = vld [vmem:[#allocation2 + $0x10] sm:$0xf]
    %v38 = vld [vmem:[#allocation2 + $0x14] sm:$0xf]
    %v39 = vld [vmem:[#allocation2 + $0x18] sm:$0xf]
    %v40 = vld [vmem:[#allocation2 + $0x1c] sm:$0xf]
    %v41 = vld [vmem:[%s3] sm:$0x3]
    %v42 = vld [vmem:[%s0] sm:$0xf]
    %v43 = vld [vmem:[%s0 + $0x4] sm:$0xf]
    %v44 = vld [vmem:[%s0 + $0x8] sm:$0xf]
    %v45 = vld [vmem:[%s0 + $0xc] sm:$0xf]
    %v46 = vld [vmem:[%s0 + $0x10] sm:$0xf]
    %v47 = vld [vmem:[%s0 + $0x14] sm:$0xf]
    %v48 = vld [vmem:[%s0 + $0x18] sm:$0xf]
    %v49 = vld [vmem:[%s0 + $0x1c] sm:$0xf]
    %v50 = vlaneseq
    %v51 = vshrl.u32 %v50, 7
    %v52 = vsub.s32 0, %v51
    %v53 = vrot.slane %v41, %v52
    %v62 = vunpack.c.l.b16 %v42
    %v63 = vunpack.c.l.b16 %v43
    %v64 = vunpack.c.l.b16 %v44
    %v65 = vunpack.c.l.b16 %v45
    %v66 = vunpack.c.l.b16 %v46
    %v67 = vunpack.c.l.b16 %v47
    %v68 = vunpack.c.l.b16 %v48
    %v69 = vunpack.c.l.b16 %v49
    %v70 = vpack.c.b16 %v63, %v62
    %v71 = vpack.c.b16 %v65, %v64
    %v72 = vpack.c.b16 %v67, %v66
    %v73 = vpack.c.b16 %v69, %v68
    %v78 = vunpack.c.l.b16 %v33
    %v79 = vunpack.c.l.b16 %v34
    %v80 = vunpack.c.l.b16 %v35
    %v81 = vunpack.c.l.b16 %v36
    %v82 = vpack.c.b16 %v79, %v78
    %v83 = vpack.c.b16 %v81, %v80
    %vm86 = vcmask 261120
    %v88 = vsel %vm86, %v70, 0
    %v91 = vsel %vm86, %v71, 0
    %v94 = vsel %vm86, %v72, 0
    %v97 = vsel %vm86, %v73, 0
    %99 = vmatprep.subr.bf16.mxu0 0
    %100 = vmatpush1.bf16.msra.mxu0 %v82
    %101 = vmatprep.subr.bf16.mxu0 0
    %102 = vmatpush1.bf16.msra.mxu0 %v83
    %103 = vmatprep.subr.bf16.mxu0 0
    %104 = vmatpush1.bf16.msra.mxu0 0
    %105 = vmatprep.subr.bf16.mxu0 0
    %106 = vmatpush1.bf16.msra.mxu0 0
    %107 = vmatprep.subr.bf16.mxu0 0
    %108 = vmatpush1.bf16.msra.mxu0 0
    %109 = vmatprep.subr.bf16.mxu0 0
    %110 = vmatpush1.bf16.msra.mxu0 0
    %111 = vmatprep.subr.bf16.mxu0 0
    %112 = vmatpush1.bf16.msra.mxu0 0
    %113 = vmatprep.subr.bf16.mxu0 0
    %114 = vmatpush1.bf16.msra.mxu0 0
    %115 = vmatprep.subr.bf16.mxu0 0
    %116 = vmatpush1.bf16.msra.mxu0 0
    %117 = vmatprep.subr.bf16.mxu0 0
    %118 = vmatpush1.bf16.msra.mxu0 0
    %119 = vmatprep.subr.bf16.mxu0 0
    %120 = vmatpush1.bf16.msra.mxu0 0
    %121 = vmatprep.subr.bf16.mxu0 0
    %122 = vmatpush1.bf16.msra.mxu0 0
    %123 = vmatprep.subr.bf16.mxu0 0
    %124 = vmatpush1.bf16.msra.mxu0 0
    %125 = vmatprep.subr.bf16.mxu0 0
    %126 = vmatpush1.bf16.msra.mxu0 0
    %127 = vmatprep.subr.bf16.mxu0 0
    %128 = vmatpush1.bf16.msra.mxu0 0
    %129 = vmatprep.subr.bf16.mxu0 0
    %130 = vmatpush1.bf16.msra.mxu0 0
    %131 = vmatprep.mubr.bf16.mxu0 0
    %132 = vmatmul.mubr.bf16.gmra.mrb[0].mxu0 %v88
    %v133 = vpop.f32.mrb[0].mxu0
    %v134 = vadd.f32 %v53, %v133
    %v135 = vpop.f32.mrb[0].mxu0
    %v136 = vpop.f32.mrb[0].mxu0
    %v137 = vadd.f32 %v53, %v136
    %v138 = vpop.f32.mrb[0].mxu0
    %139 = vmatprep.mubr.bf16.mxu0 0
    %140 = vmatmul.mubr.bf16.gmra.mrb[0].mxu0 %v91
    %v141 = vpop.f32.mrb[0].mxu0
    %v142 = vadd.f32 %v53, %v141
    %v143 = vpop.f32.mrb[0].mxu0
    %v144 = vpop.f32.mrb[0].mxu0
    %v145 = vadd.f32 %v53, %v144
    %v146 = vpop.f32.mrb[0].mxu0
    %147 = vmatprep.mubr.bf16.mxu0 0
    %148 = vmatmul.mubr.bf16.gmra.mrb[0].mxu0 %v94
    %v149 = vpop.f32.mrb[0].mxu0
    %v150 = vadd.f32 %v53, %v149
    %v151 = vpop.f32.mrb[0].mxu0
    %v152 = vpop.f32.mrb[0].mxu0
    %v153 = vadd.f32 %v53, %v152
    %v154 = vpop.f32.mrb[0].mxu0
    %155 = vmatprep.mubr.bf16.mxu0 0
    %156 = vmatmul.mubr.bf16.gmra.mrb[0].mxu0 %v97
    %v157 = vpop.f32.mrb[0].mxu0
    %v158 = vadd.f32 %v53, %v157
    %v159 = vpop.f32.mrb[0].mxu0
    %v160 = vpop.f32.mrb[0].mxu0
    %v161 = vadd.f32 %v53, %v160
    %v162 = vpop.f32.mrb[0].mxu0
    %163 = vdwg.mxu0
    %s164 = scalar_lea.vmem %s1, 8
    %v165 = vld [vmem:[%s164] sm:$0xff]
    %v166 = vpack.c.bf16 %v165, %v165
    %v169 = vunpack.c.l.b16 %v37
    %v170 = vunpack.c.l.b16 %v38
    %v171 = vpack.c.b16 %v170, %v169
    %172 = vrot.lane.b32.xlu0 %v171, 64
    %v173 = vpop.permute.xlu0 %172
    %vm175 = vcmask 130048
    %v177 = vsel %vm175, %v166, 0
    %179 = vmatprep.subr.bf16.mxu0 0
    %180 = vmatpush1.bf16.msra.mxu0 %v173
    %181 = vmatprep.subr.bf16.mxu0 0
    %182 = vmatpush1.bf16.msra.mxu0 0
    %183 = vmatprep.subr.bf16.mxu0 0
    %184 = vmatpush1.bf16.msra.mxu0 0
    %185 = vmatprep.subr.bf16.mxu0 0
    %186 = vmatpush1.bf16.msra.mxu0 0
    %187 = vmatprep.subr.bf16.mxu0 0
    %188 = vmatpush1.bf16.msra.mxu0 0
    %189 = vmatprep.subr.bf16.mxu0 0
    %190 = vmatpush1.bf16.msra.mxu0 0
    %191 = vmatprep.subr.bf16.mxu0 0
    %192 = vmatpush1.bf16.msra.mxu0 0
    %193 = vmatprep.subr.bf16.mxu0 0
    %194 = vmatpush1.bf16.msra.mxu0 0
    %195 = vmatprep.subr.bf16.mxu0 0
    %196 = vmatpush1.bf16.msra.mxu0 0
    %197 = vmatprep.subr.bf16.mxu0 0
    %198 = vmatpush1.bf16.msra.mxu0 0
    %199 = vmatprep.subr.bf16.mxu0 0
    %200 = vmatpush1.bf16.msra.mxu0 0
    %201 = vmatprep.subr.bf16.mxu0 0
    %202 = vmatpush1.bf16.msra.mxu0 0
    %203 = vmatprep.subr.bf16.mxu0 0
    %204 = vmatpush1.bf16.msra.mxu0 0
    %205 = vmatprep.subr.bf16.mxu0 0
    %206 = vmatpush1.bf16.msra.mxu0 0
    %207 = vmatprep.subr.bf16.mxu0 0
    %208 = vmatpush1.bf16.msra.mxu0 0
    %209 = vmatprep.subr.bf16.mxu0 0
    %210 = vmatpush1.bf16.msra.mxu0 0
    %211 = vmatprep.mubr.bf16.mxu0 0
    %212 = vmatmul.mubr.bf16.gmra.mrb[0].mxu0 %v177
    %v213 = vpop.f32.mrb[0].mxu0
    %v214 = vadd.f32 0.0, %v213
    %v215 = vpop.f32.mrb[0].mxu0
    %v216 = vpop.f32.mrb[0].mxu0
    %v217 = vpop.f32.mrb[0].mxu0
    %218 = vdwg.mxu0
    %220 = vrot.lane.b32.xlu0 %v214, 64
    %v221 = vpop.permute.xlu0 %220
    %v223 = vadd.f32 %v161, %v221
    %v224 = vxor.u32 %v223, 2147483648
    %v225 = vmul.f32 %v224, 1.442695
    %v226 = vpow.pop %v225
    %v227 = vadd.f32 %v226, 1.0
    %v228 = vrcp.pop %v227
    %v229 = vmul.f32 1.0, %v228
    %s230 = scalar_lea.vmem %s1, 24
    %v231 = vld [vmem:[%s230] sm:$0xff]
    %233 = vrot.lane.b32.xlu0 %v231, 80
    %v234 = vpop.permute.xlu0 %233
    %v236 = vmul.f32 %v229, %v234
    %v237 = vtanh.pop %v223
    %239 = vrot.lane.b32.xlu0 %v237, 80
    %v240 = vpop.permute.xlu0 %239
    %v242 = vmul.f32 %v229, %v240
    %244 = vrot.lane.b32.xlu0 %v242, 16
    %v245 = vpop.permute.xlu0 %244
    %v247 = vadd.f32 %v236, %v245
    %v248 = vtanh.pop %v247
    %250 = vrot.lane.b32.xlu0 %v248, 16
    %v251 = vpop.permute.xlu0 %250
    %v253 = vmul.f32 %v229, %v251
    %v254 = vld [vmem:[%s1] sm:$0xff]
    %s255 = scalar_lea.vmem %s1, 16
    %v256 = vld [vmem:[%s255] sm:$0xff]
    %v257 = vpack.c.bf16 %v254, %v254
    %v260 = vsel %vm175, %v257, 0
    %262 = vmatprep.subr.bf16.mxu0 0
    %263 = vmatpush1.bf16.msra.mxu0 %v171
    %264 = vmatprep.subr.bf16.mxu0 0
    %265 = vmatpush1.bf16.msra.mxu0 0
    %266 = vmatprep.subr.bf16.mxu0 0
    %267 = vmatpush1.bf16.msra.mxu0 0
    %268 = vmatprep.subr.bf16.mxu0 0
    %269 = vmatpush1.bf16.msra.mxu0 0
    %270 = vmatprep.subr.bf16.mxu0 0
    %271 = vmatpush1.bf16.msra.mxu0 0
    %272 = vmatprep.subr.bf16.mxu0 0
    %273 = vmatpush1.bf16.msra.mxu0 0
    %274 = vmatprep.subr.bf16.mxu0 0
    %275 = vmatpush1.bf16.msra.mxu0 0
    %276 = vmatprep.subr.bf16.mxu0 0
    %277 = vmatpush1.bf16.msra.mxu0 0
    %278 = vmatprep.subr.bf16.mxu0 0
    %279 = vmatpush1.bf16.msra.mxu0 0
    %280 = vmatprep.subr.bf16.mxu0 0
    %281 = vmatpush1.bf16.msra.mxu0 0
    %282 = vmatprep.subr.bf16.mxu0 0
    %283 = vmatpush1.bf16.msra.mxu0 0
    %284 = vmatprep.subr.bf16.mxu0 0
    %285 = vmatpush1.bf16.msra.mxu0 0
    %286 = vmatprep.subr.bf16.mxu0 0
    %287 = vmatpush1.bf16.msra.mxu0 0
    %288 = vmatprep.subr.bf16.mxu0 0
    %289 = vmatpush1.bf16.msra.mxu0 0
    %290 = vmatprep.subr.bf16.mxu0 0
    %291 = vmatpush1.bf16.msra.mxu0 0
    %292 = vmatprep.subr.bf16.mxu0 0
    %293 = vmatpush1.bf16.msra.mxu0 0
    %294 = vmatprep.mubr.bf16.mxu0 0
    %295 = vmatmul.mubr.bf16.gmra.mrb[0].mxu0 %v260
    %v296 = vpop.f32.mrb[0].mxu0
    %v297 = vadd.f32 0.0, %v296
    %v298 = vpop.f32.mrb[0].mxu0
    %v299 = vpop.f32.mrb[0].mxu0
    %v300 = vpop.f32.mrb[0].mxu0
    %301 = vdwg.mxu0
    %v302 = vadd.f32 %v134, %v297
    %v303 = vxor.u32 %v302, 2147483648
    %v304 = vmul.f32 %v303, 1.442695
    %v305 = vpow.pop %v304
    %v306 = vadd.f32 %v305, 1.0
    %v307 = vrcp.pop %v306
    %v308 = vmul.f32 1.0, %v307
    %310 = vrot.lane.b32.xlu0 %v256, 16
    %v311 = vpop.permute.xlu0 %310
    %v313 = vmul.f32 %v308, %v311
    %v314 = vtanh.pop %v302
    %316 = vrot.lane.b32.xlu0 %v314, 80
    %v317 = vpop.permute.xlu0 %316
    %v319 = vmul.f32 %v308, %v317
    %321 = vrot.lane.b32.xlu0 %v319, 16
    %v322 = vpop.permute.xlu0 %321
    %v324 = vadd.f32 %v313, %v322
    %v325 = vtanh.pop %v324
    %327 = vrot.lane.b32.xlu0 %v325, 16
    %v328 = vpop.permute.xlu0 %327
    %v330 = vmul.f32 %v308, %v328
    %v331 = vpack.c.bf16 %v330, %v330
    %333 = vrot.lane.b32.xlu0 %v331, 96
    %v334 = vpop.permute.xlu0 %333
    %v336 = vsel %vm175, %v334, 0
    %338 = vmatprep.subr.bf16.mxu0 0
    %339 = vmatpush1.bf16.msra.mxu0 %v171
    %340 = vmatprep.subr.bf16.mxu0 0
    %341 = vmatpush1.bf16.msra.mxu0 0
    %342 = vmatprep.subr.bf16.mxu0 0
    %343 = vmatpush1.bf16.msra.mxu0 0
    %344 = vmatprep.subr.bf16.mxu0 0
    %345 = vmatpush1.bf16.msra.mxu0 0
    %346 = vmatprep.subr.bf16.mxu0 0
    %347 = vmatpush1.bf16.msra.mxu0 0
    %348 = vmatprep.subr.bf16.mxu0 0
    %349 = vmatpush1.bf16.msra.mxu0 0
    %350 = vmatprep.subr.bf16.mxu0 0
    %351 = vmatpush1.bf16.msra.mxu0 0
    %352 = vmatprep.subr.bf16.mxu0 0
    %353 = vmatpush1.bf16.msra.mxu0 0
    %354 = vmatprep.subr.bf16.mxu0 0
    %355 = vmatpush1.bf16.msra.mxu0 0
    %356 = vmatprep.subr.bf16.mxu0 0
    %357 = vmatpush1.bf16.msra.mxu0 0
    %358 = vmatprep.subr.bf16.mxu0 0
    %359 = vmatpush1.bf16.msra.mxu0 0
    %360 = vmatprep.subr.bf16.mxu0 0
    %361 = vmatpush1.bf16.msra.mxu0 0
    %362 = vmatprep.subr.bf16.mxu0 0
    %363 = vmatpush1.bf16.msra.mxu0 0
    %364 = vmatprep.subr.bf16.mxu0 0
    %365 = vmatpush1.bf16.msra.mxu0 0
    %366 = vmatprep.subr.bf16.mxu0 0
    %367 = vmatpush1.bf16.msra.mxu0 0
    %368 = vmatprep.subr.bf16.mxu0 0
    %369 = vmatpush1.bf16.msra.mxu0 0
    %370 = vmatprep.mubr.bf16.mxu0 0
    %371 = vmatmul.mubr.bf16.gmra.mrb[0].mxu0 %v336
    %v372 = vpop.f32.mrb[0].mxu0
    %v373 = vadd.f32 0.0, %v372
    %v374 = vpop.f32.mrb[0].mxu0
    %v375 = vpop.f32.mrb[0].mxu0
    %v376 = vpop.f32.mrb[0].mxu0
    %377 = vdwg.mxu0
    %v378 = vadd.f32 %v137, %v373
    %v379 = vxor.u32 %v378, 2147483648
    %v380 = vmul.f32 %v379, 1.442695
    %v381 = vpow.pop %v380
    %v382 = vadd.f32 %v381, 1.0
    %v383 = vrcp.pop %v382
    %v384 = vmul.f32 1.0, %v383
    %v385 = vmul.f32 %v384, %v324
    %v386 = vtanh.pop %v378
    %388 = vrot.lane.b32.xlu0 %v386, 80
    %v389 = vpop.permute.xlu0 %388
    %v391 = vmul.f32 %v384, %v389
    %393 = vrot.lane.b32.xlu0 %v391, 16
    %v394 = vpop.permute.xlu0 %393
    %v396 = vadd.f32 %v385, %v394
    %v397 = vtanh.pop %v396
    %399 = vrot.lane.b32.xlu0 %v397, 16
    %v400 = vpop.permute.xlu0 %399
    %v402 = vmul.f32 %v384, %v400
    %v403 = vpack.c.bf16 %v402, %v402
    %405 = vrot.lane.b32.xlu0 %v403, 96
    %v406 = vpop.permute.xlu0 %405
    %v408 = vsel %vm175, %v406, 0
    %410 = vmatprep.subr.bf16.mxu0 0
    %411 = vmatpush1.bf16.msra.mxu0 %v171
    %412 = vmatprep.subr.bf16.mxu0 0
    %413 = vmatpush1.bf16.msra.mxu0 0
    %414 = vmatprep.subr.bf16.mxu0 0
    %415 = vmatpush1.bf16.msra.mxu0 0
    %416 = vmatprep.subr.bf16.mxu0 0
    %417 = vmatpush1.bf16.msra.mxu0 0
    %418 = vmatprep.subr.bf16.mxu0 0
    %419 = vmatpush1.bf16.msra.mxu0 0
    %420 = vmatprep.subr.bf16.mxu0 0
    %421 = vmatpush1.bf16.msra.mxu0 0
    %422 = vmatprep.subr.bf16.mxu0 0
    %423 = vmatpush1.bf16.msra.mxu0 0
    %424 = vmatprep.subr.bf16.mxu0 0
    %425 = vmatpush1.bf16.msra.mxu0 0
    %426 = vmatprep.subr.bf16.mxu0 0
    %427 = vmatpush1.bf16.msra.mxu0 0
    %428 = vmatprep.subr.bf16.mxu0 0
    %429 = vmatpush1.bf16.msra.mxu0 0
    %430 = vmatprep.subr.bf16.mxu0 0
    %431 = vmatpush1.bf16.msra.mxu0 0
    %432 = vmatprep.subr.bf16.mxu0 0
    %433 = vmatpush1.bf16.msra.mxu0 0
    %434 = vmatprep.subr.bf16.mxu0 0
    %435 = vmatpush1.bf16.msra.mxu0 0
    %436 = vmatprep.subr.bf16.mxu0 0
    %437 = vmatpush1.bf16.msra.mxu0 0
    %438 = vmatprep.subr.bf16.mxu0 0
    %439 = vmatpush1.bf16.msra.mxu0 0
    %440 = vmatprep.subr.bf16.mxu0 0
    %441 = vmatpush1.bf16.msra.mxu0 0
    %442 = vmatprep.mubr.bf16.mxu0 0
    %443 = vmatmul.mubr.bf16.gmra.mrb[0].mxu0 %v408
    %v444 = vpop.f32.mrb[0].mxu0
    %v445 = vadd.f32 0.0, %v444
    %v446 = vpop.f32.mrb[0].mxu0
    %v447 = vpop.f32.mrb[0].mxu0
    %v448 = vpop.f32.mrb[0].mxu0
    %449 = vdwg.mxu0
    %v450 = vadd.f32 %v142, %v445
    %v451 = vxor.u32 %v450, 2147483648
    %v452 = vmul.f32 %v451, 1.442695
    %v453 = vpow.pop %v452
    %v454 = vadd.f32 %v453, 1.0
    %v455 = vrcp.pop %v454
    %v456 = vmul.f32 1.0, %v455
    %v457 = vmul.f32 %v456, %v396
    %v458 = vtanh.pop %v450
    %460 = vrot.lane.b32.xlu0 %v458, 80
    %v461 = vpop.permute.xlu0 %460
    %v463 = vmul.f32 %v456, %v461
    %465 = vrot.lane.b32.xlu0 %v463, 16
    %v466 = vpop.permute.xlu0 %465
    %v468 = vadd.f32 %v457, %v466
    %v469 = vtanh.pop %v468
    %471 = vrot.lane.b32.xlu0 %v469, 16
    %v472 = vpop.permute.xlu0 %471
    %v474 = vmul.f32 %v456, %v472
    %v475 = vpack.c.bf16 %v474, %v474
    %477 = vrot.lane.b32.xlu0 %v475, 96
    %v478 = vpop.permute.xlu0 %477
    %v480 = vsel %vm175, %v478, 0
    %482 = vmatprep.subr.bf16.mxu0 0
    %483 = vmatpush1.bf16.msra.mxu0 %v171
    %484 = vmatprep.subr.bf16.mxu0 0
    %485 = vmatpush1.bf16.msra.mxu0 0
    %486 = vmatprep.subr.bf16.mxu0 0
    %487 = vmatpush1.bf16.msra.mxu0 0
    %488 = vmatprep.subr.bf16.mxu0 0
    %489 = vmatpush1.bf16.msra.mxu0 0
    %490 = vmatprep.subr.bf16.mxu0 0
    %491 = vmatpush1.bf16.msra.mxu0 0
    %492 = vmatprep.subr.bf16.mxu0 0
    %493 = vmatpush1.bf16.msra.mxu0 0
    %494 = vmatprep.subr.bf16.mxu0 0
    %495 = vmatpush1.bf16.msra.mxu0 0
    %496 = vmatprep.subr.bf16.mxu0 0
    %497 = vmatpush1.bf16.msra.mxu0 0
    %498 = vmatprep.subr.bf16.mxu0 0
    %499 = vmatpush1.bf16.msra.mxu0 0
    %500 = vmatprep.subr.bf16.mxu0 0
    %501 = vmatpush1.bf16.msra.mxu0 0
    %502 = vmatprep.subr.bf16.mxu0 0
    %503 = vmatpush1.bf16.msra.mxu0 0
    %504 = vmatprep.subr.bf16.mxu0 0
    %505 = vmatpush1.bf16.msra.mxu0 0
    %506 = vmatprep.subr.bf16.mxu0 0
    %507 = vmatpush1.bf16.msra.mxu0 0
    %508 = vmatprep.subr.bf16.mxu0 0
    %509 = vmatpush1.bf16.msra.mxu0 0
    %510 = vmatprep.subr.bf16.mxu0 0
    %511 = vmatpush1.bf16.msra.mxu0 0
    %512 = vmatprep.subr.bf16.mxu0 0
    %513 = vmatpush1.bf16.msra.mxu0 0
    %514 = vmatprep.mubr.bf16.mxu0 0
    %515 = vmatmul.mubr.bf16.gmra.mrb[0].mxu0 %v480
    %v516 = vpop.f32.mrb[0].mxu0
    %v517 = vadd.f32 0.0, %v516
    %v518 = vpop.f32.mrb[0].mxu0
    %v519 = vpop.f32.mrb[0].mxu0
    %v520 = vpop.f32.mrb[0].mxu0
    %521 = vdwg.mxu0
    %v522 = vadd.f32 %v145, %v517
    %v523 = vxor.u32 %v522, 2147483648
    %v524 = vmul.f32 %v523, 1.442695
    %v525 = vpow.pop %v524
    %v526 = vadd.f32 %v525, 1.0
    %v527 = vrcp.pop %v526
    %v528 = vmul.f32 1.0, %v527
    %v529 = vmul.f32 %v528, %v468
    %v530 = vtanh.pop %v522
    %532 = vrot.lane.b32.xlu0 %v530, 80
    %v533 = vpop.permute.xlu0 %532
    %v535 = vmul.f32 %v528, %v533
    %537 = vrot.lane.b32.xlu0 %v535, 16
    %v538 = vpop.permute.xlu0 %537
    %v540 = vadd.f32 %v529, %v538
    %v541 = vtanh.pop %v540
    %543 = vrot.lane.b32.xlu0 %v541, 16
    %v544 = vpop.permute.xlu0 %543
    %v546 = vmul.f32 %v528, %v544
    %v547 = vpack.c.bf16 %v546, %v546
    %549 = vrot.lane.b32.xlu0 %v547, 96
    %v550 = vpop.permute.xlu0 %549
    %v552 = vsel %vm175, %v550, 0
    %554 = vmatprep.subr.bf16.mxu0 0
    %555 = vmatpush1.bf16.msra.mxu0 %v171
    %556 = vmatprep.subr.bf16.mxu0 0
    %557 = vmatpush1.bf16.msra.mxu0 0
    %558 = vmatprep.subr.bf16.mxu0 0
    %559 = vmatpush1.bf16.msra.mxu0 0
    %560 = vmatprep.subr.bf16.mxu0 0
    %561 = vmatpush1.bf16.msra.mxu0 0
    %562 = vmatprep.subr.bf16.mxu0 0
    %563 = vmatpush1.bf16.msra.mxu0 0
    %564 = vmatprep.subr.bf16.mxu0 0
    %565 = vmatpush1.bf16.msra.mxu0 0
    %566 = vmatprep.subr.bf16.mxu0 0
    %567 = vmatpush1.bf16.msra.mxu0 0
    %568 = vmatprep.subr.bf16.mxu0 0
    %569 = vmatpush1.bf16.msra.mxu0 0
    %570 = vmatprep.subr.bf16.mxu0 0
    %571 = vmatpush1.bf16.msra.mxu0 0
    %572 = vmatprep.subr.bf16.mxu0 0
    %573 = vmatpush1.bf16.msra.mxu0 0
    %574 = vmatprep.subr.bf16.mxu0 0
    %575 = vmatpush1.bf16.msra.mxu0 0
    %576 = vmatprep.subr.bf16.mxu0 0
    %577 = vmatpush1.bf16.msra.mxu0 0
    %578 = vmatprep.subr.bf16.mxu0 0
    %579 = vmatpush1.bf16.msra.mxu0 0
    %580 = vmatprep.subr.bf16.mxu0 0
    %581 = vmatpush1.bf16.msra.mxu0 0
    %582 = vmatprep.subr.bf16.mxu0 0
    %583 = vmatpush1.bf16.msra.mxu0 0
    %584 = vmatprep.subr.bf16.mxu0 0
    %585 = vmatpush1.bf16.msra.mxu0 0
    %586 = vmatprep.mubr.bf16.mxu0 0
    %587 = vmatmul.mubr.bf16.gmra.mrb[0].mxu0 %v552
    %v588 = vpop.f32.mrb[0].mxu0
    %v589 = vadd.f32 0.0, %v588
    %v590 = vpop.f32.mrb[0].mxu0
    %v591 = vpop.f32.mrb[0].mxu0
    %v592 = vpop.f32.mrb[0].mxu0
    %593 = vdwg.mxu0
    %v594 = vadd.f32 %v150, %v589
    %v595 = vxor.u32 %v594, 2147483648
    %v596 = vmul.f32 %v595, 1.442695
    %v597 = vpow.pop %v596
    %v598 = vadd.f32 %v597, 1.0
    %v599 = vrcp.pop %v598
    %v600 = vmul.f32 1.0, %v599
    %v601 = vmul.f32 %v600, %v540
    %v602 = vtanh.pop %v594
    %604 = vrot.lane.b32.xlu0 %v602, 80
    %v605 = vpop.permute.xlu0 %604
    %v607 = vmul.f32 %v600, %v605
    %609 = vrot.lane.b32.xlu0 %v607, 16
    %v610 = vpop.permute.xlu0 %609
    %v612 = vadd.f32 %v601, %v610
    %v613 = vtanh.pop %v612
    %615 = vrot.lane.b32.xlu0 %v613, 16
    %v616 = vpop.permute.xlu0 %615
    %v618 = vmul.f32 %v600, %v616
    %v619 = vpack.c.bf16 %v618, %v618
    %621 = vrot.lane.b32.xlu0 %v619, 96
    %v622 = vpop.permute.xlu0 %621
    %v624 = vsel %vm175, %v622, 0
    %626 = vmatprep.subr.bf16.mxu0 0
    %627 = vmatpush1.bf16.msra.mxu0 %v171
    %628 = vmatprep.subr.bf16.mxu0 0
    %629 = vmatpush1.bf16.msra.mxu0 0
    %630 = vmatprep.subr.bf16.mxu0 0
    %631 = vmatpush1.bf16.msra.mxu0 0
    %632 = vmatprep.subr.bf16.mxu0 0
    %633 = vmatpush1.bf16.msra.mxu0 0
    %634 = vmatprep.subr.bf16.mxu0 0
    %635 = vmatpush1.bf16.msra.mxu0 0
    %636 = vmatprep.subr.bf16.mxu0 0
    %637 = vmatpush1.bf16.msra.mxu0 0
    %638 = vmatprep.subr.bf16.mxu0 0
    %639 = vmatpush1.bf16.msra.mxu0 0
    %640 = vmatprep.subr.bf16.mxu0 0
    %641 = vmatpush1.bf16.msra.mxu0 0
    %642 = vmatprep.subr.bf16.mxu0 0
    %643 = vmatpush1.bf16.msra.mxu0 0
    %644 = vmatprep.subr.bf16.mxu0 0
    %645 = vmatpush1.bf16.msra.mxu0 0
    %646 = vmatprep.subr.bf16.mxu0 0
    %647 = vmatpush1.bf16.msra.mxu0 0
    %648 = vmatprep.subr.bf16.mxu0 0
    %649 = vmatpush1.bf16.msra.mxu0 0
    %650 = vmatprep.subr.bf16.mxu0 0
    %651 = vmatpush1.bf16.msra.mxu0 0
    %652 = vmatprep.subr.bf16.mxu0 0
    %653 = vmatpush1.bf16.msra.mxu0 0
    %654 = vmatprep.subr.bf16.mxu0 0
    %655 = vmatpush1.bf16.msra.mxu0 0
    %656 = vmatprep.subr.bf16.mxu0 0
    %657 = vmatpush1.bf16.msra.mxu0 0
    %658 = vmatprep.mubr.bf16.mxu0 0
    %659 = vmatmul.mubr.bf16.gmra.mrb[0].mxu0 %v624
    %v660 = vpop.f32.mrb[0].mxu0
    %v661 = vadd.f32 0.0, %v660
    %v662 = vpop.f32.mrb[0].mxu0
    %v663 = vpop.f32.mrb[0].mxu0
    %v664 = vpop.f32.mrb[0].mxu0
    %665 = vdwg.mxu0
    %v666 = vadd.f32 %v153, %v661
    %v667 = vxor.u32 %v666, 2147483648
    %v668 = vmul.f32 %v667, 1.442695
    %v669 = vpow.pop %v668
    %v670 = vadd.f32 %v669, 1.0
    %v671 = vrcp.pop %v670
    %v672 = vmul.f32 1.0, %v671
    %v673 = vmul.f32 %v672, %v612
    %v674 = vtanh.pop %v666
    %676 = vrot.lane.b32.xlu0 %v674, 80
    %v677 = vpop.permute.xlu0 %676
    %v679 = vmul.f32 %v672, %v677
    %681 = vrot.lane.b32.xlu0 %v679, 16
    %v682 = vpop.permute.xlu0 %681
    %v684 = vadd.f32 %v673, %v682
    %v685 = vtanh.pop %v684
    %687 = vrot.lane.b32.xlu0 %v685, 16
    %v688 = vpop.permute.xlu0 %687
    %v690 = vmul.f32 %v672, %v688
    %v691 = vpack.c.bf16 %v690, %v690
    %693 = vrot.lane.b32.xlu0 %v691, 96
    %v694 = vpop.permute.xlu0 %693
    %v696 = vsel %vm175, %v694, 0
    %698 = vmatprep.subr.bf16.mxu0 0
    %699 = vmatpush1.bf16.msra.mxu0 %v171
    %700 = vmatprep.subr.bf16.mxu0 0
    %701 = vmatpush1.bf16.msra.mxu0 0
    %702 = vmatprep.subr.bf16.mxu0 0
    %703 = vmatpush1.bf16.msra.mxu0 0
    %704 = vmatprep.subr.bf16.mxu0 0
    %705 = vmatpush1.bf16.msra.mxu0 0
    %706 = vmatprep.subr.bf16.mxu0 0
    %707 = vmatpush1.bf16.msra.mxu0 0
    %708 = vmatprep.subr.bf16.mxu0 0
    %709 = vmatpush1.bf16.msra.mxu0 0
    %710 = vmatprep.subr.bf16.mxu0 0
    %711 = vmatpush1.bf16.msra.mxu0 0
    %712 = vmatprep.subr.bf16.mxu0 0
    %713 = vmatpush1.bf16.msra.mxu0 0
    %714 = vmatprep.subr.bf16.mxu0 0
    %715 = vmatpush1.bf16.msra.mxu0 0
    %716 = vmatprep.subr.bf16.mxu0 0
    %717 = vmatpush1.bf16.msra.mxu0 0
    %718 = vmatprep.subr.bf16.mxu0 0
    %719 = vmatpush1.bf16.msra.mxu0 0
    %720 = vmatprep.subr.bf16.mxu0 0
    %721 = vmatpush1.bf16.msra.mxu0 0
    %722 = vmatprep.subr.bf16.mxu0 0
    %723 = vmatpush1.bf16.msra.mxu0 0
    %724 = vmatprep.subr.bf16.mxu0 0
    %725 = vmatpush1.bf16.msra.mxu0 0
    %726 = vmatprep.subr.bf16.mxu0 0
    %727 = vmatpush1.bf16.msra.mxu0 0
    %728 = vmatprep.subr.bf16.mxu0 0
    %729 = vmatpush1.bf16.msra.mxu0 0
    %730 = vmatprep.mubr.bf16.mxu0 0
    %731 = vmatmul.mubr.bf16.gmra.mrb[0].mxu0 %v696
    %v732 = vpop.f32.mrb[0].mxu0
    %v733 = vadd.f32 0.0, %v732
    %v734 = vpop.f32.mrb[0].mxu0
    %v735 = vpop.f32.mrb[0].mxu0
    %v736 = vpop.f32.mrb[0].mxu0
    %737 = vdwg.mxu0
    %v738 = vadd.f32 %v158, %v733
    %v739 = vxor.u32 %v738, 2147483648
    %v740 = vmul.f32 %v739, 1.442695
    %v741 = vpow.pop %v740
    %v742 = vadd.f32 %v741, 1.0
    %v743 = vrcp.pop %v742
    %v744 = vmul.f32 1.0, %v743
    %v745 = vmul.f32 %v744, %v684
    %v746 = vtanh.pop %v738
    %748 = vrot.lane.b32.xlu0 %v746, 80
    %v749 = vpop.permute.xlu0 %748
    %v751 = vmul.f32 %v744, %v749
    %753 = vrot.lane.b32.xlu0 %v751, 16
    %v754 = vpop.permute.xlu0 %753
    %v756 = vadd.f32 %v745, %v754
    %v757 = vtanh.pop %v756
    %759 = vrot.lane.b32.xlu0 %v757, 16
    %v760 = vpop.permute.xlu0 %759
    %v762 = vmul.f32 %v744, %v760
    %v763 = vpack.c.bf16 %v762, %v762
    %765 = vrot.lane.b32.xlu0 %v763, 96
    %v766 = vpop.permute.xlu0 %765
    %v768 = vsel %vm175, %v766, 0
    %770 = vmatprep.subr.bf16.mxu0 0
    %771 = vmatpush1.bf16.msra.mxu0 %v171
    %772 = vmatprep.subr.bf16.mxu0 0
    %773 = vmatpush1.bf16.msra.mxu0 0
    %774 = vmatprep.subr.bf16.mxu0 0
    %775 = vmatpush1.bf16.msra.mxu0 0
    %776 = vmatprep.subr.bf16.mxu0 0
    %777 = vmatpush1.bf16.msra.mxu0 0
    %778 = vmatprep.subr.bf16.mxu0 0
    %779 = vmatpush1.bf16.msra.mxu0 0
    %780 = vmatprep.subr.bf16.mxu0 0
    %781 = vmatpush1.bf16.msra.mxu0 0
    %782 = vmatprep.subr.bf16.mxu0 0
    %783 = vmatpush1.bf16.msra.mxu0 0
    %784 = vmatprep.subr.bf16.mxu0 0
    %785 = vmatpush1.bf16.msra.mxu0 0
    %786 = vmatprep.subr.bf16.mxu0 0
    %787 = vmatpush1.bf16.msra.mxu0 0
    %788 = vmatprep.subr.bf16.mxu0 0
    %789 = vmatpush1.bf16.msra.mxu0 0
    %790 = vmatprep.subr.bf16.mxu0 0
    %791 = vmatpush1.bf16.msra.mxu0 0
    %792 = vmatprep.subr.bf16.mxu0 0
    %793 = vmatpush1.bf16.msra.mxu0 0
    %794 = vmatprep.subr.bf16.mxu0 0
    %795 = vmatpush1.bf16.msra.mxu0 0
    %796 = vmatprep.subr.bf16.mxu0 0
    %797 = vmatpush1.bf16.msra.mxu0 0
    %798 = vmatprep.subr.bf16.mxu0 0
    %799 = vmatpush1.bf16.msra.mxu0 0
    %800 = vmatprep.subr.bf16.mxu0 0
    %801 = vmatpush1.bf16.msra.mxu0 0
    %802 = vmatprep.mubr.bf16.mxu0 0
    %803 = vmatmul.mubr.bf16.gmra.mrb[0].mxu0 %v768
    %v804 = vpop.f32.mrb[0].mxu0
    %v805 = vadd.f32 0.0, %v804
    %v806 = vpop.f32.mrb[0].mxu0
    %v807 = vpop.f32.mrb[0].mxu0
    %v808 = vpop.f32.mrb[0].mxu0
    %809 = vdwg.mxu0
    %v810 = vadd.f32 %v161, %v805
    %v811 = vxor.u32 %v810, 2147483648
    %v812 = vmul.f32 %v811, 1.442695
    %v813 = vpow.pop %v812
    %v814 = vadd.f32 %v813, 1.0
    %v815 = vrcp.pop %v814
    %v816 = vmul.f32 1.0, %v815
    %v817 = vmul.f32 %v816, %v756
    %v818 = vtanh.pop %v810
    %820 = vrot.lane.b32.xlu0 %v818, 80
    %v821 = vpop.permute.xlu0 %820
    %v823 = vmul.f32 %v816, %v821
    %825 = vrot.lane.b32.xlu0 %v823, 16
    %v826 = vpop.permute.xlu0 %825
    %v828 = vadd.f32 %v817, %v826
    %v829 = vtanh.pop %v828
    %831 = vrot.lane.b32.xlu0 %v829, 16
    %v832 = vpop.permute.xlu0 %831
    %v834 = vmul.f32 %v816, %v832
    %v835 = vpack.c.bf16 %v834, %v834
    %v836 = vpack.c.bf16 %v253, %v253
    %838 = vrot.lane.b32.xlu0 %v836, 32
    %v839 = vpop.permute.xlu0 %838
    %v842 = vunpack.c.l.b16 %v39
    %v843 = vunpack.c.l.b16 %v40
    %v844 = vpack.c.b16 %v843, %v842
    %845 = vrot.lane.b32.xlu0 %v844, 120
    %v846 = vpop.permute.xlu0 %845
    %v849 = vsel %vm175, %v839, 0
    %851 = vmatprep.subr.bf16.mxu0 0
    %852 = vmatpush1.bf16.msra.mxu0 %v846
    %853 = vmatprep.subr.bf16.mxu0 0
    %854 = vmatpush1.bf16.msra.mxu0 0
    %855 = vmatprep.subr.bf16.mxu0 0
    %856 = vmatpush1.bf16.msra.mxu0 0
    %857 = vmatprep.subr.bf16.mxu0 0
    %858 = vmatpush1.bf16.msra.mxu0 0
    %859 = vmatprep.subr.bf16.mxu0 0
    %860 = vmatpush1.bf16.msra.mxu0 0
    %861 = vmatprep.subr.bf16.mxu0 0
    %862 = vmatpush1.bf16.msra.mxu0 0
    %863 = vmatprep.subr.bf16.mxu0 0
    %864 = vmatpush1.bf16.msra.mxu0 0
    %865 = vmatprep.subr.bf16.mxu0 0
    %866 = vmatpush1.bf16.msra.mxu0 0
    %867 = vmatprep.subr.bf16.mxu0 0
    %868 = vmatpush1.bf16.msra.mxu0 0
    %869 = vmatprep.subr.bf16.mxu0 0
    %870 = vmatpush1.bf16.msra.mxu0 0
    %871 = vmatprep.subr.bf16.mxu0 0
    %872 = vmatpush1.bf16.msra.mxu0 0
    %873 = vmatprep.subr.bf16.mxu0 0
    %874 = vmatpush1.bf16.msra.mxu0 0
    %875 = vmatprep.subr.bf16.mxu0 0
    %876 = vmatpush1.bf16.msra.mxu0 0
    %877 = vmatprep.subr.bf16.mxu0 0
    %878 = vmatpush1.bf16.msra.mxu0 0
    %879 = vmatprep.subr.bf16.mxu0 0
    %880 = vmatpush1.bf16.msra.mxu0 0
    %881 = vmatprep.subr.bf16.mxu0 0
    %882 = vmatpush1.bf16.msra.mxu0 0
    %883 = vmatprep.mubr.bf16.mxu0 0
    %884 = vmatmul.mubr.bf16.gmra.mrb[0].mxu0 %v849
    %v885 = vpop.f32.mrb[0].mxu0
    %v886 = vadd.f32 0.0, %v885
    %v887 = vpop.f32.mrb[0].mxu0
    %v888 = vpop.f32.mrb[0].mxu0
    %v889 = vpop.f32.mrb[0].mxu0
    %890 = vdwg.mxu0
    %892 = vrot.lane.b32.xlu0 %v835, 96
    %v893 = vpop.permute.xlu0 %892
    %v896 = vsel %vm175, %v893, 0
    %898 = vmatprep.subr.bf16.mxu0 0
    %899 = vmatpush1.bf16.msra.mxu0 %v844
    %900 = vmatprep.subr.bf16.mxu0 0
    %901 = vmatpush1.bf16.msra.mxu0 0
    %902 = vmatprep.subr.bf16.mxu0 0
    %903 = vmatpush1.bf16.msra.mxu0 0
    %904 = vmatprep.subr.bf16.mxu0 0
    %905 = vmatpush1.bf16.msra.mxu0 0
    %906 = vmatprep.subr.bf16.mxu0 0
    %907 = vmatpush1.bf16.msra.mxu0 0
    %908 = vmatprep.subr.bf16.mxu0 0
    %909 = vmatpush1.bf16.msra.mxu0 0
    %910 = vmatprep.subr.bf16.mxu0 0
    %911 = vmatpush1.bf16.msra.mxu0 0
    %912 = vmatprep.subr.bf16.mxu0 0
    %913 = vmatpush1.bf16.msra.mxu0 0
    %914 = vmatprep.subr.bf16.mxu0 0
    %915 = vmatpush1.bf16.msra.mxu0 0
    %916 = vmatprep.subr.bf16.mxu0 0
    %917 = vmatpush1.bf16.msra.mxu0 0
    %918 = vmatprep.subr.bf16.mxu0 0
    %919 = vmatpush1.bf16.msra.mxu0 0
    %920 = vmatprep.subr.bf16.mxu0 0
    %921 = vmatpush1.bf16.msra.mxu0 0
    %922 = vmatprep.subr.bf16.mxu0 0
    %923 = vmatpush1.bf16.msra.mxu0 0
    %924 = vmatprep.subr.bf16.mxu0 0
    %925 = vmatpush1.bf16.msra.mxu0 0
    %926 = vmatprep.subr.bf16.mxu0 0
    %927 = vmatpush1.bf16.msra.mxu0 0
    %928 = vmatprep.subr.bf16.mxu0 0
    %929 = vmatpush1.bf16.msra.mxu0 0
    %930 = vmatprep.mubr.bf16.mxu0 0
    %931 = vmatmul.mubr.bf16.gmra.mrb[0].mxu0 %v896
    %v932 = vpop.f32.mrb[0].mxu0
    %v933 = vadd.f32 %v886, %v932
    %v934 = vpop.f32.mrb[0].mxu0
    %v935 = vpop.f32.mrb[0].mxu0
    %v936 = vpop.f32.mrb[0].mxu0
    %937 = vdwg.mxu0
    %v938 = vlaneseq
    %v939 = vshrl.u32 %v938, 7
    %v940 = vsub.s32 1, %v939
    %v941 = vrot.slane %v41, %v940
    %v942 = vadd.f32 %v933, %v941
    %vm943 = vcmask 64512
    %v944 = vsel %vm943, %v942, -inf
    %945 = vmax.xlane.f32.xlu0 %v944
    %v946 = vpop.xlane.xlu0 %945
    %v947 = vsub.f32 %v942, %v946
    %v948 = vmul.f32 %v947, 1.442695
    %v949 = vpow.pop %v948
    %v950 = vsel %vm943, %v949, 0.0
    %951 = vadd.xlane.f32.xlu0 %v950
    %v952 = vpop.xlane.xlu0 %951
    %v953 = vrcp.pop %v952
    %v954 = vmul.f32 %v949, %v953
    %955 = vst.msk [vmem:[#allocation5] sm:$0xff] %vm943, %v954
    // Predicated region
    $region22: #{tpu_custom_call.1} parent=1 // pred_check
      _
    $region23: #{tpu_custom_call.1} parent=1 // pred_check_branch
      %957 = sbr.rel (0) target = $region25
    $region24: #{tpu_custom_call.1} parent=1 // pred_region
      %s959 = ssub.s32 128, 128
      %960 = vsyncadd [#allocation4], %s959
      %s962 = sshll.u32 [#allocation5], 4
      %s963 = int_to_ptr.vmem [resolvable:$true] %s962
      %965 = dma.vmem_to_hbm [thread:$0]  %s963, 128, %s4, [#allocation4]
    $region25: #{tpu_custom_call.1} parent=1 // pred_fallthru
      _
    // Predicated region
    $region26: #{tpu_custom_call.1} parent=1 // pred_check
      _
    $region27: #{tpu_custom_call.1} parent=1 // pred_check_branch
      %967 = sbr.rel (0) target = $region29
    $region28: #{tpu_custom_call.1} parent=1 // pred_region
      %968 = dma.done [#allocation4], 128
    $region29: #{tpu_custom_call.1} parent=1 // pred_fallthru
      _
    %969 = vsyncpa [#allocation3], 1
    %970 = vsyncpa [#allocation4], 1

</llo_original>
